<compile_context>
chip_gen: v7x
topology: tpu7x:2x2x1
jax: 0.10.0
libtpu: 0.0.40
codegen_flags: <defaults>
</compile_context>

<pallas_src>
import functools

import jax
import jax.numpy as jnp
from jax.experimental import pallas as pl
from jax.experimental.pallas import tpu as pltpu

NEG_SLOPE = 0.01      # torch.nn.functional.leaky_relu default
OUT_FEATURES = 3      # layer4 output width in the PyTorch module
LANE = 128
SUBLANE = 8


def _round_up(n, m):
    return (n + m - 1) // m * m


def _leaky_relu(x):
    return jnp.where(x > 0, x, NEG_SLOPE * x)


def mlp_kernel(x_ref,
               w1_ref, b1_ref,
               w2_ref, b2_ref,
               w3_ref, b3_ref,
               w4_ref, b4_ref,
               out_ref):
    # Entire forward pass fused: 4 MXU matmuls + VPU leaky-relu per batch tile.
    h = jnp.dot(x_ref[...], w1_ref[...],
                preferred_element_type=jnp.float32) + b1_ref[...]
    h = _leaky_relu(h)
    h = jnp.dot(h, w2_ref[...],
                preferred_element_type=jnp.float32) + b2_ref[...]
    h = _leaky_relu(h)
    h = jnp.dot(h, w3_ref[...],
                preferred_element_type=jnp.float32) + b3_ref[...]
    h = _leaky_relu(h)
    h = jnp.dot(h, w4_ref[...],
                preferred_element_type=jnp.float32) + b4_ref[...]
    out_ref[...] = h.astype(out_ref.dtype)


def prepare_params(params):
    """One-time packing (hoisted out of the per-call jitted path).

    - Transpose PyTorch (out, in) weights to (in, out).
    - Zero-pad layer1's contraction dim (in_features -> multiple of 128 lanes).
    - Zero-pad layer4's output dim (3 -> 128 lanes) for lane-dense stores.
    - Biases become (1, out) rows so they broadcast over the batch sublanes.
    """
    w1 = jnp.asarray(params["w1"], jnp.float32).T        # (in, 256)
    w2 = jnp.asarray(params["w2"], jnp.float32).T        # (256, 128)
    w3 = jnp.asarray(params["w3"], jnp.float32).T        # (128, 128)
    w4 = jnp.asarray(params["w4"], jnp.float32).T        # (128, 3)

    in_f = w1.shape[0]
    k_pad = max(LANE, _round_up(in_f, LANE))
    w1 = jnp.pad(w1, ((0, k_pad - in_f), (0, 0)))        # (k_pad, 256)

    out_f = w4.shape[1]
    n_pad = max(LANE, _round_up(out_f, LANE))
    w4 = jnp.pad(w4, ((0, 0), (0, n_pad - out_f)))       # (128, 128)
    b4 = jnp.pad(jnp.asarray(params["b4"], jnp.float32),
                 ((0, n_pad - out_f),))

    return {
        "w1": w1, "b1": jnp.asarray(params["b1"], jnp.float32)[None, :],
        "w2": w2, "b2": jnp.asarray(params["b2"], jnp.float32)[None, :],
        "w3": w3, "b3": jnp.asarray(params["b3"], jnp.float32)[None, :],
        "w4": w4, "b4": b4[None, :],
    }


@functools.partial(jax.jit, static_argnames=("block_m",))
def neural_net_forward(x, packed, *, block_m=1024):
    """x: (B, in_features) fp32.  packed: output of prepare_params()."""
    B, in_f = x.shape
    w1, b1 = packed["w1"], packed["b1"]
    w2, b2 = packed["w2"], packed["b2"]
    w3, b3 = packed["w3"], packed["b3"]
    w4, b4 = packed["w4"], packed["b4"]

    k_pad = w1.shape[0]      # lane-padded contraction width (>= in_features)
    n_pad = w4.shape[1]      # lane-padded output width (128)

    # Lane-dense first-layer contraction: zero-pad x columns to k_pad.
    if in_f != k_pad:
        x = jnp.pad(x, ((0, 0), (0, k_pad - in_f)))

    # Batch tile: whole (sublane-rounded) batch when small, block_m rows when
    # large; pad batch so the grid divides evenly (extra rows sliced off).
    tm = min(block_m, _round_up(B, SUBLANE))
    b_pad = _round_up(B, tm)
    if b_pad != B:
        x = jnp.pad(x, ((0, b_pad - B), (0, 0)))

    grid = (b_pad // tm,)

    def resident(a):
        # Constant index_map: fetched once, stays VMEM-resident across the grid.
        nd = a.ndim
        return pl.BlockSpec(a.shape, lambda i, _nd=nd: (0,) * _nd)

    out = pl.pallas_call(
        mlp_kernel,
        out_shape=jax.ShapeDtypeStruct((b_pad, n_pad), jnp.float32),
        grid=grid,
        in_specs=[pl.BlockSpec((tm, k_pad), lambda i: (i, 0)),
                  resident(w1), resident(b1),
                  resident(w2), resident(b2),
                  resident(w3), resident(b3),
                  resident(w4), resident(b4)],
        out_specs=pl.BlockSpec((tm, n_pad), lambda i: (i, 0)),
        compiler_params=pltpu.CompilerParams(
            dimension_semantics=("parallel",)),   # shards batch tiles on v7x's 2 TCs
    )(x, w1, b1, w2, b2, w3, b3, w4, b4)

    return out[:B, :OUT_FEATURES]


def init_params(key, in_features):
    """Deterministic synthetic init; shapes match nn.Linear's (out, in) weights."""
    ks = jax.random.split(key, 8)

    def lin(kw, kb, fan_in, fan_out):
        bound = 1.0 / jnp.sqrt(fan_in)
        w = jax.random.uniform(kw, (fan_out, fan_in), jnp.float32, -bound, bound)
        b = jax.random.uniform(kb, (fan_out,), jnp.float32, -bound, bound)
        return w, b

    w1, b1 = lin(ks[0], ks[1], in_features, 256)
    w2, b2 = lin(ks[2], ks[3], 256, 128)
    w3, b3 = lin(ks[4], ks[5], 128, 128)
    w4, b4 = lin(ks[6], ks[7], 128, 3)
    return {"w1": w1, "b1": b1, "w2": w2, "b2": b2,
            "w3": w3, "b3": b3, "w4": w4, "b4": b4}


def reference_forward(x, p):
    """Pure-JAX reference mirroring the PyTorch forward."""
    h = _leaky_relu(x @ p["w1"].T + p["b1"])
    h = _leaky_relu(h @ p["w2"].T + p["b2"])
    h = _leaky_relu(h @ p["w3"].T + p["b3"])
    return h @ p["w4"].T + p["b4"]


if __name__ == "__main__":
    key = jax.random.PRNGKey(0)
    k_x, k_p = jax.random.split(key)

    batch = 8
    in_features = 32

    x = jax.random.normal(k_x, (batch, in_features), dtype=jnp.float32)
    params = init_params(k_p, in_features)

    packed = prepare_params(params)          # one-time prep, outside the hot path

    out = neural_net_forward(x, packed)
    out = jax.block_until_ready(out)

    ref = reference_forward(x, params)
    assert out.shape == (batch, OUT_FEATURES)
    assert jnp.allclose(out, ref, atol=1e-4, rtol=1e-4)

    # Also exercise the batch-tiled path (grid > 1, non-multiple batch).
    big_b = 2500
    xb = jax.random.normal(k_x, (big_b, in_features), dtype=jnp.float32)
    out_b = jax.block_until_ready(neural_net_forward(xb, packed))
    ref_b = reference_forward(xb, params)
    assert out_b.shape == (big_b, OUT_FEATURES)
    assert jnp.allclose(out_b, ref_b, atol=1e-3, rtol=1e-3)

    print("KERNEL_OK")
</pallas_src>

<mosaic_0001>
module attributes {stable_mosaic.version = 11 : i64} {
  func.func @mlp_kernel(%arg0: i32, %arg1: memref<8x128xf32, #tpu.memory_space<vmem>>, %arg2: memref<128x256xf32, #tpu.memory_space<vmem>>, %arg3: memref<1x256xf32, #tpu.memory_space<vmem>>, %arg4: memref<256x128xf32, #tpu.memory_space<vmem>>, %arg5: memref<1x128xf32, #tpu.memory_space<vmem>>, %arg6: memref<128x128xf32, #tpu.memory_space<vmem>>, %arg7: memref<1x128xf32, #tpu.memory_space<vmem>>, %arg8: memref<128x128xf32, #tpu.memory_space<vmem>>, %arg9: memref<1x128xf32, #tpu.memory_space<vmem>>, %arg10: memref<8x128xf32, #tpu.memory_space<vmem>>) attributes {dimension_semantics = [#tpu.dimension_semantics<parallel>], iteration_bounds = array<i64: 1>, scalar_prefetch = 0 : i64, scratch_operands = 0 : i64, tpu.core_type = #tpu.core_type<tc>, window_params = [{transform_indices = @transform_0, window_bounds = array<i64: 8, 128>}, {pipeline_mode = #tpu.pipeline_mode<synchronous>, transform_indices = @transform_1, window_bounds = array<i64: 128, 256>}, {pipeline_mode = #tpu.pipeline_mode<synchronous>, transform_indices = @transform_2, window_bounds = array<i64: 1, 256>}, {pipeline_mode = #tpu.pipeline_mode<synchronous>, transform_indices = @transform_3, window_bounds = array<i64: 256, 128>}, {pipeline_mode = #tpu.pipeline_mode<synchronous>, transform_indices = @transform_4, window_bounds = array<i64: 1, 128>}, {pipeline_mode = #tpu.pipeline_mode<synchronous>, transform_indices = @transform_5, window_bounds = array<i64: 128, 128>}, {pipeline_mode = #tpu.pipeline_mode<synchronous>, transform_indices = @transform_6, window_bounds = array<i64: 1, 128>}, {pipeline_mode = #tpu.pipeline_mode<synchronous>, transform_indices = @transform_7, window_bounds = array<i64: 128, 128>}, {pipeline_mode = #tpu.pipeline_mode<synchronous>, transform_indices = @transform_8, window_bounds = array<i64: 1, 128>}, {transform_indices = @transform_9, window_bounds = array<i64: 8, 128>}]} {
    %c0 = arith.constant 0 : index
    %c0_0 = arith.constant 0 : index
    %0 = vector.load %arg1[%c0, %c0_0] : memref<8x128xf32, #tpu.memory_space<vmem>>, vector<8x128xf32>
    %c0_1 = arith.constant 0 : index
    %c0_2 = arith.constant 0 : index
    %1 = vector.load %arg2[%c0_1, %c0_2] : memref<128x256xf32, #tpu.memory_space<vmem>>, vector<128x256xf32>
    %cst = arith.constant dense<0.000000e+00> : vector<8x256xf32>
    %2 = tpu.matmul %0, %1, %cst {dimension_numbers = #tpu.dot_dimension_numbers<[1], [0], [0], [1], [0, 0, 1, 1], [], []>} : vector<8x128xf32>, vector<128x256xf32>, vector<8x256xf32> -> vector<8x256xf32>
    %c0_3 = arith.constant 0 : index
    %c0_4 = arith.constant 0 : index
    %3 = vector.load %arg3[%c0_3, %c0_4] : memref<1x256xf32, #tpu.memory_space<vmem>>, vector<1x256xf32>
    %4 = vector.broadcast %3 : vector<1x256xf32> to vector<8x256xf32>
    %5 = arith.addf %2, %4 : vector<8x256xf32>
    %cst_5 = arith.constant 0.000000e+00 : f32
    %6 = vector.broadcast %cst_5 : f32 to vector<8x256xf32>
    %7 = arith.cmpf ogt, %5, %6 : vector<8x256xf32>
    %cst_6 = arith.constant 0.00999999977 : f32
    %8 = vector.broadcast %cst_6 : f32 to vector<8x256xf32>
    %9 = arith.mulf %8, %5 : vector<8x256xf32>
    %10 = arith.select %7, %5, %9 : vector<8x256xi1>, vector<8x256xf32>
    %c0_7 = arith.constant 0 : index
    %c0_8 = arith.constant 0 : index
    %11 = vector.load %arg4[%c0_7, %c0_8] : memref<256x128xf32, #tpu.memory_space<vmem>>, vector<256x128xf32>
    %cst_9 = arith.constant dense<0.000000e+00> : vector<8x128xf32>
    %12 = tpu.matmul %10, %11, %cst_9 {dimension_numbers = #tpu.dot_dimension_numbers<[1], [0], [0], [1], [0, 0, 1, 1], [], []>} : vector<8x256xf32>, vector<256x128xf32>, vector<8x128xf32> -> vector<8x128xf32>
    %c0_10 = arith.constant 0 : index
    %c0_11 = arith.constant 0 : index
    %13 = vector.load %arg5[%c0_10, %c0_11] : memref<1x128xf32, #tpu.memory_space<vmem>>, vector<1x128xf32>
    %14 = vector.broadcast %13 : vector<1x128xf32> to vector<8x128xf32>
    %15 = arith.addf %12, %14 : vector<8x128xf32>
    %cst_12 = arith.constant 0.000000e+00 : f32
    %16 = vector.broadcast %cst_12 : f32 to vector<8x128xf32>
    %17 = arith.cmpf ogt, %15, %16 : vector<8x128xf32>
    %cst_13 = arith.constant 0.00999999977 : f32
    %18 = vector.broadcast %cst_13 : f32 to vector<8x128xf32>
    %19 = arith.mulf %18, %15 : vector<8x128xf32>
    %20 = arith.select %17, %15, %19 : vector<8x128xi1>, vector<8x128xf32>
    %c0_14 = arith.constant 0 : index
    %c0_15 = arith.constant 0 : index
    %21 = vector.load %arg6[%c0_14, %c0_15] : memref<128x128xf32, #tpu.memory_space<vmem>>, vector<128x128xf32>
    %cst_16 = arith.constant dense<0.000000e+00> : vector<8x128xf32>
    %22 = tpu.matmul %20, %21, %cst_16 {dimension_numbers = #tpu.dot_dimension_numbers<[1], [0], [0], [1], [0, 0, 1, 1], [], []>} : vector<8x128xf32>, vector<128x128xf32>, vector<8x128xf32> -> vector<8x128xf32>
    %c0_17 = arith.constant 0 : index
    %c0_18 = arith.constant 0 : index
    %23 = vector.load %arg7[%c0_17, %c0_18] : memref<1x128xf32, #tpu.memory_space<vmem>>, vector<1x128xf32>
    %24 = vector.broadcast %23 : vector<1x128xf32> to vector<8x128xf32>
    %25 = arith.addf %22, %24 : vector<8x128xf32>
    %cst_19 = arith.constant 0.000000e+00 : f32
    %26 = vector.broadcast %cst_19 : f32 to vector<8x128xf32>
    %27 = arith.cmpf ogt, %25, %26 : vector<8x128xf32>
    %cst_20 = arith.constant 0.00999999977 : f32
    %28 = vector.broadcast %cst_20 : f32 to vector<8x128xf32>
    %29 = arith.mulf %28, %25 : vector<8x128xf32>
    %30 = arith.select %27, %25, %29 : vector<8x128xi1>, vector<8x128xf32>
    %c0_21 = arith.constant 0 : index
    %c0_22 = arith.constant 0 : index
    %31 = vector.load %arg8[%c0_21, %c0_22] : memref<128x128xf32, #tpu.memory_space<vmem>>, vector<128x128xf32>
    %cst_23 = arith.constant dense<0.000000e+00> : vector<8x128xf32>
    %32 = tpu.matmul %30, %31, %cst_23 {dimension_numbers = #tpu.dot_dimension_numbers<[1], [0], [0], [1], [0, 0, 1, 1], [], []>} : vector<8x128xf32>, vector<128x128xf32>, vector<8x128xf32> -> vector<8x128xf32>
    %c0_24 = arith.constant 0 : index
    %c0_25 = arith.constant 0 : index
    %33 = vector.load %arg9[%c0_24, %c0_25] : memref<1x128xf32, #tpu.memory_space<vmem>>, vector<1x128xf32>
    %34 = vector.broadcast %33 : vector<1x128xf32> to vector<8x128xf32>
    %35 = arith.addf %32, %34 : vector<8x128xf32>
    %c0_26 = arith.constant 0 : index
    %c0_27 = arith.constant 0 : index
    %36 = vector.load %arg10[%c0_26, %c0_27] : memref<8x128xf32, #tpu.memory_space<vmem>>, vector<8x128xf32>
    tpu.vector_store %arg10[%c0_26, %c0_27], %35 {strides = array<i32>} : memref<8x128xf32, #tpu.memory_space<vmem>>, vector<8x128xf32>,
    return
  }
  func.func @transform_0(%arg0: i32) -> (i32, i32) {
    %c0_i32 = arith.constant 0 : i32
    %c0_i32_0 = arith.constant 0 : i32
    return %arg0, %c0_i32 : i32, i32
  }
  func.func @transform_1(%arg0: i32) -> (i32, i32) {
    %c0_i32 = arith.constant 0 : i32
    %c0_i32_0 = arith.constant 0 : i32
    %c0_i32_1 = arith.constant 0 : i32
    return %c0_i32, %c0_i32_0 : i32, i32
  }
  func.func @transform_2(%arg0: i32) -> (i32, i32) {
    %c0_i32 = arith.constant 0 : i32
    %c0_i32_0 = arith.constant 0 : i32
    %c0_i32_1 = arith.constant 0 : i32
    return %c0_i32, %c0_i32_0 : i32, i32
  }
  func.func @transform_3(%arg0: i32) -> (i32, i32) {
    %c0_i32 = arith.constant 0 : i32
    %c0_i32_0 = arith.constant 0 : i32
    %c0_i32_1 = arith.constant 0 : i32
    return %c0_i32, %c0_i32_0 : i32, i32
  }
  func.func @transform_4(%arg0: i32) -> (i32, i32) {
    %c0_i32 = arith.constant 0 : i32
    %c0_i32_0 = arith.constant 0 : i32
    %c0_i32_1 = arith.constant 0 : i32
    return %c0_i32, %c0_i32_0 : i32, i32
  }
  func.func @transform_5(%arg0: i32) -> (i32, i32) {
    %c0_i32 = arith.constant 0 : i32
    %c0_i32_0 = arith.constant 0 : i32
    %c0_i32_1 = arith.constant 0 : i32
    return %c0_i32, %c0_i32_0 : i32, i32
  }
  func.func @transform_6(%arg0: i32) -> (i32, i32) {
    %c0_i32 = arith.constant 0 : i32
    %c0_i32_0 = arith.constant 0 : i32
    %c0_i32_1 = arith.constant 0 : i32
    return %c0_i32, %c0_i32_0 : i32, i32
  }
  func.func @transform_7(%arg0: i32) -> (i32, i32) {
    %c0_i32 = arith.constant 0 : i32
    %c0_i32_0 = arith.constant 0 : i32
    %c0_i32_1 = arith.constant 0 : i32
    return %c0_i32, %c0_i32_0 : i32, i32
  }
  func.func @transform_8(%arg0: i32) -> (i32, i32) {
    %c0_i32 = arith.constant 0 : i32
    %c0_i32_0 = arith.constant 0 : i32
    %c0_i32_1 = arith.constant 0 : i32
    return %c0_i32, %c0_i32_0 : i32, i32
  }
  func.func @transform_9(%arg0: i32) -> (i32, i32) {
    %c0_i32 = arith.constant 0 : i32
    %c0_i32_0 = arith.constant 0 : i32
    return %arg0, %c0_i32 : i32, i32
  }
}

</mosaic_0001>

<llo_original>
// kernel: neural_net_forward.1
$region0: #{neural_net_forward.1}
  #allocation0 [shape = 'u32[]', space=smem, size = 0x4, offset = 0x4, fixed_abs, tag = 'smem constant byte address 0x4 - core index']
  #allocation1 [shape = 'u32[144,128]{1,0:T(1,128)}', space=vmem, size = 0x12000, scoped, tag = 'internal scratch']
  %s0 = inlined_call_operand.vmem [shape: f32[8,128], index: 0, kind: input, shape index: {}]
  %s1 = inlined_call_operand.hbm [shape: f32[128,256], index: 1, kind: input, shape index: {}]
  %s2 = inlined_call_operand.vmem [shape: f32[1,256], index: 2, kind: input, shape index: {}]
  %s3 = inlined_call_operand.hbm [shape: f32[256,128], index: 3, kind: input, shape index: {}]
  %s4 = inlined_call_operand.vmem [shape: f32[1,128], index: 4, kind: input, shape index: {}]
  %s5 = inlined_call_operand.hbm [shape: f32[128,128], index: 5, kind: input, shape index: {}]
  %s6 = inlined_call_operand.vmem [shape: f32[1,128], index: 6, kind: input, shape index: {}]
  %s7 = inlined_call_operand.hbm [shape: f32[128,128], index: 7, kind: input, shape index: {}]
  %s8 = inlined_call_operand.vmem [shape: f32[1,128], index: 8, kind: input, shape index: {}]
  %s9 = inlined_call_operand.vmem [shape: f32[8,128], index: 9, kind: output, shape index: {}]
  %s10 = sld [smem:[#allocation0]]
  $region62: #{neural_net_forward.1} parent=0
    _
  %s12 = ssub.s32 1, %s10
  %s13 = scalar_select 0, %s12, %s10
  $region1: #{neural_net_forward.1} parent=0
    #allocation2 [shape = 'u8[131072]{0}', space=vmem, size = 0x20000, scoped, tag = 'input window, operand 1, single buffered']
    #allocation3 [shape = 's32[1]{0}', space=sflag, size = 0x4, scoped, tag = 'scoped memory for neural_net_forward.1']
    #allocation4 [shape = 'u8[131072]{0}', space=vmem, size = 0x20000, scoped, tag = 'input window, operand 3, single buffered']
    #allocation5 [shape = 's32[1]{0}', space=sflag, size = 0x4, scoped, tag = 'scoped memory for neural_net_forward.1']
    #allocation6 [shape = 'u8[65536]{0}', space=vmem, size = 0x10000, scoped, tag = 'input window, operand 5, single buffered']
    #allocation7 [shape = 'u8[65536]{0}', space=vmem, size = 0x10000, scoped, tag = 'input window, operand 7, single buffered']
    #allocation8 [shape = 's32[1]{0}', space=sflag, size = 0x4, scoped, tag = 'scoped memory for neural_net_forward.1']
    %14 = vsyncpa [#allocation3], 0
    %15 = vsyncpa [#allocation5], 0
    %16 = vsyncpa [#allocation8], 0
    // Predicated region
    $region2: #{neural_net_forward.1} parent=1 // pred_check
      _
    $region3: #{neural_net_forward.1} parent=1 // pred_check_branch
      %18 = sbr.rel (0) target = $region5
    $region4: #{neural_net_forward.1} parent=1 // pred_region
      _
    $region5: #{neural_net_forward.1} parent=1 // pred_fallthru
      _
    // Predicated region
    $region6: #{neural_net_forward.1} parent=1 // pred_check
      _
    $region7: #{neural_net_forward.1} parent=1 // pred_check_branch
      %20 = sbr.rel (0) target = $region9
    $region8: #{neural_net_forward.1} parent=1 // pred_region
      %s22 = ssub.s32 4096, 4096
      %23 = vsyncadd [#allocation3], %s22
      %s24 = sshll.u32 [#allocation2], 4
      %s25 = int_to_ptr.vmem [resolvable:$true] %s24
      %30 = dma.hbm_to_vmem [thread:$0]  %s1, 4096, %s25, [#allocation3], 256, 256, 16
    $region9: #{neural_net_forward.1} parent=1 // pred_fallthru
      _
    // Predicated region
    $region10: #{neural_net_forward.1} parent=1 // pred_check
      _
    $region11: #{neural_net_forward.1} parent=1 // pred_check_branch
      %32 = sbr.rel (0) target = $region13
    $region12: #{neural_net_forward.1} parent=1 // pred_region
      _
    $region13: #{neural_net_forward.1} parent=1 // pred_fallthru
      _
    // Predicated region
    $region14: #{neural_net_forward.1} parent=1 // pred_check
      _
    $region15: #{neural_net_forward.1} parent=1 // pred_check_branch
      %34 = sbr.rel (0) target = $region17
    $region16: #{neural_net_forward.1} parent=1 // pred_region
      %s36 = ssub.s32 4096, 4096
      %37 = vsyncadd [#allocation5], %s36
      %s38 = sshll.u32 [#allocation4], 4
      %s39 = int_to_ptr.vmem [resolvable:$true] %s38
      %44 = dma.hbm_to_vmem [thread:$0]  %s3, 4096, %s39, [#allocation5], 128, 128, 8
    $region17: #{neural_net_forward.1} parent=1 // pred_fallthru
      _
    // Predicated region
    $region18: #{neural_net_forward.1} parent=1 // pred_check
      _
    $region19: #{neural_net_forward.1} parent=1 // pred_check_branch
      %46 = sbr.rel (0) target = $region21
    $region20: #{neural_net_forward.1} parent=1 // pred_region
      _
    $region21: #{neural_net_forward.1} parent=1 // pred_fallthru
      _
    // Predicated region
    $region22: #{neural_net_forward.1} parent=1 // pred_check
      _
    $region23: #{neural_net_forward.1} parent=1 // pred_check_branch
      %48 = sbr.rel (0) target = $region25
    $region24: #{neural_net_forward.1} parent=1 // pred_region
      %s50 = ssub.s32 2048, 2048
      %51 = vsyncadd [#allocation5], %s50
      %s52 = sshll.u32 [#allocation6], 4
      %s53 = int_to_ptr.vmem [resolvable:$true] %s52
      %58 = dma.hbm_to_vmem [thread:$0]  %s5, 2048, %s53, [#allocation5], 128, 128, 8
    $region25: #{neural_net_forward.1} parent=1 // pred_fallthru
      _
    // Predicated region
    $region26: #{neural_net_forward.1} parent=1 // pred_check
      _
    $region27: #{neural_net_forward.1} parent=1 // pred_check_branch
      %60 = sbr.rel (0) target = $region29
    $region28: #{neural_net_forward.1} parent=1 // pred_region
      _
    $region29: #{neural_net_forward.1} parent=1 // pred_fallthru
      _
    // Predicated region
    $region30: #{neural_net_forward.1} parent=1 // pred_check
      _
    $region31: #{neural_net_forward.1} parent=1 // pred_check_branch
      %62 = sbr.rel (0) target = $region33
    $region32: #{neural_net_forward.1} parent=1 // pred_region
      %s64 = ssub.s32 2048, 2048
      %65 = vsyncadd [#allocation8], %s64
      %s66 = sshll.u32 [#allocation7], 4
      %s67 = int_to_ptr.vmem [resolvable:$true] %s66
      %72 = dma.hbm_to_vmem [thread:$0]  %s7, 2048, %s67, [#allocation8], 128, 128, 8
    $region33: #{neural_net_forward.1} parent=1 // pred_fallthru
      _
    // Predicated region
    $region34: #{neural_net_forward.1} parent=1 // pred_check
      _
    $region35: #{neural_net_forward.1} parent=1 // pred_check_branch
      %74 = sbr.rel (0) target = $region37
    $region36: #{neural_net_forward.1} parent=1 // pred_region
      _
    $region37: #{neural_net_forward.1} parent=1 // pred_fallthru
      _
    // Predicated region
    $region38: #{neural_net_forward.1} parent=1 // pred_check
      _
    $region39: #{neural_net_forward.1} parent=1 // pred_check_branch
      %76 = sbr.rel (0) target = $region41
    $region40: #{neural_net_forward.1} parent=1 // pred_region
      %77 = dma.done [#allocation3], 4096
    $region41: #{neural_net_forward.1} parent=1 // pred_fallthru
      _
    // Predicated region
    $region42: #{neural_net_forward.1} parent=1 // pred_check
      _
    $region43: #{neural_net_forward.1} parent=1 // pred_check_branch
      %79 = sbr.rel (0) target = $region45
    $region44: #{neural_net_forward.1} parent=1 // pred_region
      %80 = dma.done [#allocation5], 4096
    $region45: #{neural_net_forward.1} parent=1 // pred_fallthru
      _
    // Predicated region
    $region46: #{neural_net_forward.1} parent=1 // pred_check
      _
    $region47: #{neural_net_forward.1} parent=1 // pred_check_branch
      %82 = sbr.rel (0) target = $region49
    $region48: #{neural_net_forward.1} parent=1 // pred_region
      %83 = dma.done [#allocation5], 2048
    $region49: #{neural_net_forward.1} parent=1 // pred_fallthru
      _
    // Predicated region
    $region50: #{neural_net_forward.1} parent=1 // pred_check
      _
    $region51: #{neural_net_forward.1} parent=1 // pred_check_branch
      %85 = sbr.rel (0) target = $region53
    $region52: #{neural_net_forward.1} parent=1 // pred_region
      %86 = dma.done [#allocation8], 2048
    $region53: #{neural_net_forward.1} parent=1 // pred_fallthru
      _
    %v87 = vld [vmem:[%s0] sm:$0xff]
    %v88 = vld [vmem:[#allocation2] sm:$0xff]
    %v89 = vld [vmem:[#allocation2 + $0x8] sm:$0xff]
    %v90 = vld [vmem:[#allocation2 + $0x10] sm:$0xff]
    %v91 = vld [vmem:[#allocation2 + $0x18] sm:$0xff]
    %v92 = vld [vmem:[#allocation2 + $0x20] sm:$0xff]
    %v93 = vld [vmem:[#allocation2 + $0x28] sm:$0xff]
    %v94 = vld [vmem:[#allocation2 + $0x30] sm:$0xff]
    %v95 = vld [vmem:[#allocation2 + $0x38] sm:$0xff]
    %v96 = vld [vmem:[#allocation2 + $0x40] sm:$0xff]
    %v97 = vld [vmem:[#allocation2 + $0x48] sm:$0xff]
    %v98 = vld [vmem:[#allocation2 + $0x50] sm:$0xff]
    %v99 = vld [vmem:[#allocation2 + $0x58] sm:$0xff]
    %v100 = vld [vmem:[#allocation2 + $0x60] sm:$0xff]
    %v101 = vld [vmem:[#allocation2 + $0x68] sm:$0xff]
    %v102 = vld [vmem:[#allocation2 + $0x70] sm:$0xff]
    %v103 = vld [vmem:[#allocation2 + $0x78] sm:$0xff]
    %v104 = vld [vmem:[#allocation2 + $0x80] sm:$0xff]
    %v105 = vld [vmem:[#allocation2 + $0x88] sm:$0xff]
    %v106 = vld [vmem:[#allocation2 + $0x90] sm:$0xff]
    %v107 = vld [vmem:[#allocation2 + $0x98] sm:$0xff]
    %v108 = vld [vmem:[#allocation2 + $0xa0] sm:$0xff]
    %v109 = vld [vmem:[#allocation2 + $0xa8] sm:$0xff]
    %v110 = vld [vmem:[#allocation2 + $0xb0] sm:$0xff]
    %v111 = vld [vmem:[#allocation2 + $0xb8] sm:$0xff]
    %v112 = vld [vmem:[#allocation2 + $0xc0] sm:$0xff]
    %v113 = vld [vmem:[#allocation2 + $0xc8] sm:$0xff]
    %v114 = vld [vmem:[#allocation2 + $0xd0] sm:$0xff]
    %v115 = vld [vmem:[#allocation2 + $0xd8] sm:$0xff]
    %v116 = vld [vmem:[#allocation2 + $0xe0] sm:$0xff]
    %v117 = vld [vmem:[#allocation2 + $0xe8] sm:$0xff]
    %v118 = vld [vmem:[#allocation2 + $0xf0] sm:$0xff]
    %v119 = vld [vmem:[#allocation2 + $0xf8] sm:$0xff]
    %v120 = vld [vmem:[%s2] sm:$0x3]
    %v122 = vlaneseq
    %v123 = vshrl.u32 %v122, 7
    %v124 = vsub.s32 0, %v123
    %v125 = vrot.slane %v120, %v124
    %v126 = vlaneseq
    %v127 = vshrl.u32 %v126, 7
    %v128 = vsub.s32 1, %v127
    %v129 = vrot.slane %v120, %v128
    %132 = vmatprep.subr.mxu0 %v89
    %133 = vmatpush1.msra.mxu0 %v88
    %134 = vmatprep.subr.mxu0 %v91
    %135 = vmatpush1.msra.mxu0 %v90
    %136 = vmatprep.subr.mxu0 %v93
    %137 = vmatpush1.msra.mxu0 %v92
    %138 = vmatprep.subr.mxu0 %v95
    %139 = vmatpush1.msra.mxu0 %v94
    %140 = vmatprep.subr.mxu0 %v97
    %141 = vmatpush1.msra.mxu0 %v96
    %142 = vmatprep.subr.mxu0 %v99
    %143 = vmatpush1.msra.mxu0 %v98
    %144 = vmatprep.subr.mxu0 %v101
    %145 = vmatpush1.msra.mxu0 %v100
    %146 = vmatprep.subr.mxu0 %v103
    %147 = vmatpush1.msra.mxu0 %v102
    %148 = vmatprep.subr.mxu0 %v105
    %149 = vmatpush1.msra.mxu0 %v104
    %150 = vmatprep.subr.mxu0 %v107
    %151 = vmatpush1.msra.mxu0 %v106
    %152 = vmatprep.subr.mxu0 %v109
    %153 = vmatpush1.msra.mxu0 %v108
    %154 = vmatprep.subr.mxu0 %v111
    %155 = vmatpush1.msra.mxu0 %v110
    %156 = vmatprep.subr.mxu0 %v113
    %157 = vmatpush1.msra.mxu0 %v112
    %158 = vmatprep.subr.mxu0 %v115
    %159 = vmatpush1.msra.mxu0 %v114
    %160 = vmatprep.subr.mxu0 %v117
    %161 = vmatpush1.msra.mxu0 %v116
    %162 = vmatprep.subr.mxu0 %v119
    %163 = vmatpush1.msra.mxu0 %v118
    %164 = vmatprep.subr.mxu0 0.0
    %165 = vmatpush1.msra.mxu0 0.0
    %166 = vmatprep.subr.mxu0 0.0
    %167 = vmatpush1.msra.mxu0 0.0
    %168 = vmatprep.subr.mxu0 0.0
    %169 = vmatpush1.msra.mxu0 0.0
    %170 = vmatprep.subr.mxu0 0.0
    %171 = vmatpush1.msra.mxu0 0.0
    %172 = vmatprep.subr.mxu0 0.0
    %173 = vmatpush1.msra.mxu0 0.0
    %174 = vmatprep.subr.mxu0 0.0
    %175 = vmatpush1.msra.mxu0 0.0
    %176 = vmatprep.subr.mxu0 0.0
    %177 = vmatpush1.msra.mxu0 0.0
    %178 = vmatprep.subr.mxu0 0.0
    %179 = vmatpush1.msra.mxu0 0.0
    %180 = vmatprep.subr.mxu0 0.0
    %181 = vmatpush1.msra.mxu0 0.0
    %182 = vmatprep.subr.mxu0 0.0
    %183 = vmatpush1.msra.mxu0 0.0
    %184 = vmatprep.subr.mxu0 0.0
    %185 = vmatpush1.msra.mxu0 0.0
    %186 = vmatprep.subr.mxu0 0.0
    %187 = vmatpush1.msra.mxu0 0.0
    %188 = vmatprep.subr.mxu0 0.0
    %189 = vmatpush1.msra.mxu0 0.0
    %190 = vmatprep.subr.mxu0 0.0
    %191 = vmatpush1.msra.mxu0 0.0
    %192 = vmatprep.subr.mxu0 0.0
    %193 = vmatpush1.msra.mxu0 0.0
    %194 = vmatprep.subr.mxu0 0.0
    %195 = vmatpush1.msra.mxu0 0.0
    %196 = vmatprep.mubr.f32.mxu0 0.0
    %197 = vmatmul.mubr.f32.gmra.mrb[0].mxu0 %v87
    %v198 = vpop.f32.mrb[0].mxu0
    %v199 = vadd.f32 %v125, %v198
    %v200 = vpop.f32.mrb[0].mxu0
    %v201 = vadd.f32 %v129, %v200
    %202 = vdwg.mxu0
    %vm203 = vcmp.gt.f32.partialorder %v199, 0.0
    %vm204 = vcmp.gt.f32.partialorder %v201, 0.0
    %v205 = vmul.f32 %v199, 0.01
    %v206 = vmul.f32 %v201, 0.01
    %v207 = vsel %vm203, %v199, %v205
    %v208 = vsel %vm204, %v201, %v206
    %v209 = vld [vmem:[#allocation4] sm:$0xff]
    %v210 = vld [vmem:[#allocation4 + $0x8] sm:$0xff]
    %v211 = vld [vmem:[#allocation4 + $0x10] sm:$0xff]
    %v212 = vld [vmem:[#allocation4 + $0x18] sm:$0xff]
    %v213 = vld [vmem:[#allocation4 + $0x20] sm:$0xff]
    %v214 = vld [vmem:[#allocation4 + $0x28] sm:$0xff]
    %v215 = vld [vmem:[#allocation4 + $0x30] sm:$0xff]
    %v216 = vld [vmem:[#allocation4 + $0x38] sm:$0xff]
    %v217 = vld [vmem:[#allocation4 + $0x40] sm:$0xff]
    %v218 = vld [vmem:[#allocation4 + $0x48] sm:$0xff]
    %v219 = vld [vmem:[#allocation4 + $0x50] sm:$0xff]
    %v220 = vld [vmem:[#allocation4 + $0x58] sm:$0xff]
    %v221 = vld [vmem:[#allocation4 + $0x60] sm:$0xff]
    %v222 = vld [vmem:[#allocation4 + $0x68] sm:$0xff]
    %v223 = vld [vmem:[#allocation4 + $0x70] sm:$0xff]
    %v224 = vld [vmem:[#allocation4 + $0x78] sm:$0xff]
    %v225 = vld [vmem:[#allocation4 + $0x80] sm:$0xff]
    %v226 = vld [vmem:[#allocation4 + $0x88] sm:$0xff]
    %v227 = vld [vmem:[#allocation4 + $0x90] sm:$0xff]
    %v228 = vld [vmem:[#allocation4 + $0x98] sm:$0xff]
    %v229 = vld [vmem:[#allocation4 + $0xa0] sm:$0xff]
    %v230 = vld [vmem:[#allocation4 + $0xa8] sm:$0xff]
    %v231 = vld [vmem:[#allocation4 + $0xb0] sm:$0xff]
    %v232 = vld [vmem:[#allocation4 + $0xb8] sm:$0xff]
    %v233 = vld [vmem:[#allocation4 + $0xc0] sm:$0xff]
    %v234 = vld [vmem:[#allocation4 + $0xc8] sm:$0xff]
    %v235 = vld [vmem:[#allocation4 + $0xd0] sm:$0xff]
    %v236 = vld [vmem:[#allocation4 + $0xd8] sm:$0xff]
    %v237 = vld [vmem:[#allocation4 + $0xe0] sm:$0xff]
    %v238 = vld [vmem:[#allocation4 + $0xe8] sm:$0xff]
    %v239 = vld [vmem:[#allocation4 + $0xf0] sm:$0xff]
    %v240 = vld [vmem:[#allocation4 + $0xf8] sm:$0xff]
    %v241 = vld [vmem:[%s4] sm:$0x1]
    %v243 = vlaneseq
    %v244 = vshrl.u32 %v243, 7
    %v245 = vsub.s32 0, %v244
    %v246 = vrot.slane %v241, %v245
    %248 = vmatprep.subr.mxu0 0.0
    %249 = vmatpush1.msra.mxu0 %v209
    %250 = vmatprep.subr.mxu0 0.0
    %251 = vmatpush1.msra.mxu0 %v210
    %252 = vmatprep.subr.mxu0 0.0
    %253 = vmatpush1.msra.mxu0 %v211
    %254 = vmatprep.subr.mxu0 0.0
    %255 = vmatpush1.msra.mxu0 %v212
    %256 = vmatprep.subr.mxu0 0.0
    %257 = vmatpush1.msra.mxu0 %v213
    %258 = vmatprep.subr.mxu0 0.0
    %259 = vmatpush1.msra.mxu0 %v214
    %260 = vmatprep.subr.mxu0 0.0
    %261 = vmatpush1.msra.mxu0 %v215
    %262 = vmatprep.subr.mxu0 0.0
    %263 = vmatpush1.msra.mxu0 %v216
    %264 = vmatprep.subr.mxu0 0.0
    %265 = vmatpush1.msra.mxu0 %v217
    %266 = vmatprep.subr.mxu0 0.0
    %267 = vmatpush1.msra.mxu0 %v218
    %268 = vmatprep.subr.mxu0 0.0
    %269 = vmatpush1.msra.mxu0 %v219
    %270 = vmatprep.subr.mxu0 0.0
    %271 = vmatpush1.msra.mxu0 %v220
    %272 = vmatprep.subr.mxu0 0.0
    %273 = vmatpush1.msra.mxu0 %v221
    %274 = vmatprep.subr.mxu0 0.0
    %275 = vmatpush1.msra.mxu0 %v222
    %276 = vmatprep.subr.mxu0 0.0
    %277 = vmatpush1.msra.mxu0 %v223
    %278 = vmatprep.subr.mxu0 0.0
    %279 = vmatpush1.msra.mxu0 %v224
    %280 = vmatprep.subr.mxu0 0.0
    %281 = vmatpush1.msra.mxu0 %v225
    %282 = vmatprep.subr.mxu0 0.0
    %283 = vmatpush1.msra.mxu0 %v226
    %284 = vmatprep.subr.mxu0 0.0
    %285 = vmatpush1.msra.mxu0 %v227
    %286 = vmatprep.subr.mxu0 0.0
    %287 = vmatpush1.msra.mxu0 %v228
    %288 = vmatprep.subr.mxu0 0.0
    %289 = vmatpush1.msra.mxu0 %v229
    %290 = vmatprep.subr.mxu0 0.0
    %291 = vmatpush1.msra.mxu0 %v230
    %292 = vmatprep.subr.mxu0 0.0
    %293 = vmatpush1.msra.mxu0 %v231
    %294 = vmatprep.subr.mxu0 0.0
    %295 = vmatpush1.msra.mxu0 %v232
    %296 = vmatprep.subr.mxu0 0.0
    %297 = vmatpush1.msra.mxu0 %v233
    %298 = vmatprep.subr.mxu0 0.0
    %299 = vmatpush1.msra.mxu0 %v234
    %300 = vmatprep.subr.mxu0 0.0
    %301 = vmatpush1.msra.mxu0 %v235
    %302 = vmatprep.subr.mxu0 0.0
    %303 = vmatpush1.msra.mxu0 %v236
    %304 = vmatprep.subr.mxu0 0.0
    %305 = vmatpush1.msra.mxu0 %v237
    %306 = vmatprep.subr.mxu0 0.0
    %307 = vmatpush1.msra.mxu0 %v238
    %308 = vmatprep.subr.mxu0 0.0
    %309 = vmatpush1.msra.mxu0 %v239
    %310 = vmatprep.subr.mxu0 0.0
    %311 = vmatpush1.msra.mxu0 %v240
    %312 = vmatprep.mubr.f32.mxu0 %v208
    %313 = vmatmul.mubr.f32.gmra.mrb[0].mxu0 %v207
    %v314 = vpop.f32.mrb[0].mxu0
    %v315 = vadd.f32 %v246, %v314
    %v316 = vpop.f32.mrb[0].mxu0
    %317 = vdwg.mxu0
    %vm318 = vcmp.gt.f32.partialorder %v315, 0.0
    %v319 = vmul.f32 %v315, 0.01
    %v320 = vsel %vm318, %v315, %v319
    %v321 = vld [vmem:[#allocation6] sm:$0xff]
    %v322 = vld [vmem:[#allocation6 + $0x8] sm:$0xff]
    %v323 = vld [vmem:[#allocation6 + $0x10] sm:$0xff]
    %v324 = vld [vmem:[#allocation6 + $0x18] sm:$0xff]
    %v325 = vld [vmem:[#allocation6 + $0x20] sm:$0xff]
    %v326 = vld [vmem:[#allocation6 + $0x28] sm:$0xff]
    %v327 = vld [vmem:[#allocation6 + $0x30] sm:$0xff]
    %v328 = vld [vmem:[#allocation6 + $0x38] sm:$0xff]
    %v329 = vld [vmem:[#allocation6 + $0x40] sm:$0xff]
    %v330 = vld [vmem:[#allocation6 + $0x48] sm:$0xff]
    %v331 = vld [vmem:[#allocation6 + $0x50] sm:$0xff]
    %v332 = vld [vmem:[#allocation6 + $0x58] sm:$0xff]
    %v333 = vld [vmem:[#allocation6 + $0x60] sm:$0xff]
    %v334 = vld [vmem:[#allocation6 + $0x68] sm:$0xff]
    %v335 = vld [vmem:[#allocation6 + $0x70] sm:$0xff]
    %v336 = vld [vmem:[#allocation6 + $0x78] sm:$0xff]
    %v337 = vld [vmem:[%s6] sm:$0x1]
    %v339 = vlaneseq
    %v340 = vshrl.u32 %v339, 7
    %v341 = vsub.s32 0, %v340
    %v342 = vrot.slane %v337, %v341
    %344 = vmatprep.subr.mxu0 0.0
    %345 = vmatpush1.msra.mxu0 %v321
    %346 = vmatprep.subr.mxu0 0.0
    %347 = vmatpush1.msra.mxu0 %v322
    %348 = vmatprep.subr.mxu0 0.0
    %349 = vmatpush1.msra.mxu0 %v323
    %350 = vmatprep.subr.mxu0 0.0
    %351 = vmatpush1.msra.mxu0 %v324
    %352 = vmatprep.subr.mxu0 0.0
    %353 = vmatpush1.msra.mxu0 %v325
    %354 = vmatprep.subr.mxu0 0.0
    %355 = vmatpush1.msra.mxu0 %v326
    %356 = vmatprep.subr.mxu0 0.0
    %357 = vmatpush1.msra.mxu0 %v327
    %358 = vmatprep.subr.mxu0 0.0
    %359 = vmatpush1.msra.mxu0 %v328
    %360 = vmatprep.subr.mxu0 0.0
    %361 = vmatpush1.msra.mxu0 %v329
    %362 = vmatprep.subr.mxu0 0.0
    %363 = vmatpush1.msra.mxu0 %v330
    %364 = vmatprep.subr.mxu0 0.0
    %365 = vmatpush1.msra.mxu0 %v331
    %366 = vmatprep.subr.mxu0 0.0
    %367 = vmatpush1.msra.mxu0 %v332
    %368 = vmatprep.subr.mxu0 0.0
    %369 = vmatpush1.msra.mxu0 %v333
    %370 = vmatprep.subr.mxu0 0.0
    %371 = vmatpush1.msra.mxu0 %v334
    %372 = vmatprep.subr.mxu0 0.0
    %373 = vmatpush1.msra.mxu0 %v335
    %374 = vmatprep.subr.mxu0 0.0
    %375 = vmatpush1.msra.mxu0 %v336
    %376 = vmatprep.subr.mxu0 0.0
    %377 = vmatpush1.msra.mxu0 0.0
    %378 = vmatprep.subr.mxu0 0.0
    %379 = vmatpush1.msra.mxu0 0.0
    %380 = vmatprep.subr.mxu0 0.0
    %381 = vmatpush1.msra.mxu0 0.0
    %382 = vmatprep.subr.mxu0 0.0
    %383 = vmatpush1.msra.mxu0 0.0
    %384 = vmatprep.subr.mxu0 0.0
    %385 = vmatpush1.msra.mxu0 0.0
    %386 = vmatprep.subr.mxu0 0.0
    %387 = vmatpush1.msra.mxu0 0.0
    %388 = vmatprep.subr.mxu0 0.0
    %389 = vmatpush1.msra.mxu0 0.0
    %390 = vmatprep.subr.mxu0 0.0
    %391 = vmatpush1.msra.mxu0 0.0
    %392 = vmatprep.subr.mxu0 0.0
    %393 = vmatpush1.msra.mxu0 0.0
    %394 = vmatprep.subr.mxu0 0.0
    %395 = vmatpush1.msra.mxu0 0.0
    %396 = vmatprep.subr.mxu0 0.0
    %397 = vmatpush1.msra.mxu0 0.0
    %398 = vmatprep.subr.mxu0 0.0
    %399 = vmatpush1.msra.mxu0 0.0
    %400 = vmatprep.subr.mxu0 0.0
    %401 = vmatpush1.msra.mxu0 0.0
    %402 = vmatprep.subr.mxu0 0.0
    %403 = vmatpush1.msra.mxu0 0.0
    %404 = vmatprep.subr.mxu0 0.0
    %405 = vmatpush1.msra.mxu0 0.0
    %406 = vmatprep.subr.mxu0 0.0
    %407 = vmatpush1.msra.mxu0 0.0
    %408 = vmatprep.mubr.f32.mxu0 0.0
    %409 = vmatmul.mubr.f32.gmra.mrb[0].mxu0 %v320
    %v410 = vpop.f32.mrb[0].mxu0
    %v411 = vadd.f32 %v342, %v410
    %v412 = vpop.f32.mrb[0].mxu0
    %413 = vdwg.mxu0
    %vm414 = vcmp.gt.f32.partialorder %v411, 0.0
    %v415 = vmul.f32 %v411, 0.01
    %v416 = vsel %vm414, %v411, %v415
    %v417 = vld [vmem:[#allocation7] sm:$0xff]
    %v418 = vld [vmem:[#allocation7 + $0x8] sm:$0xff]
    %v419 = vld [vmem:[#allocation7 + $0x10] sm:$0xff]
    %v420 = vld [vmem:[#allocation7 + $0x18] sm:$0xff]
    %v421 = vld [vmem:[#allocation7 + $0x20] sm:$0xff]
    %v422 = vld [vmem:[#allocation7 + $0x28] sm:$0xff]
    %v423 = vld [vmem:[#allocation7 + $0x30] sm:$0xff]
    %v424 = vld [vmem:[#allocation7 + $0x38] sm:$0xff]
    %v425 = vld [vmem:[#allocation7 + $0x40] sm:$0xff]
    %v426 = vld [vmem:[#allocation7 + $0x48] sm:$0xff]
    %v427 = vld [vmem:[#allocation7 + $0x50] sm:$0xff]
    %v428 = vld [vmem:[#allocation7 + $0x58] sm:$0xff]
    %v429 = vld [vmem:[#allocation7 + $0x60] sm:$0xff]
    %v430 = vld [vmem:[#allocation7 + $0x68] sm:$0xff]
    %v431 = vld [vmem:[#allocation7 + $0x70] sm:$0xff]
    %v432 = vld [vmem:[#allocation7 + $0x78] sm:$0xff]
    %v433 = vld [vmem:[%s8] sm:$0x1]
    %v435 = vlaneseq
    %v436 = vshrl.u32 %v435, 7
    %v437 = vsub.s32 0, %v436
    %v438 = vrot.slane %v433, %v437
    %440 = vmatprep.subr.mxu0 0.0
    %441 = vmatpush1.msra.mxu0 %v417
    %442 = vmatprep.subr.mxu0 0.0
    %443 = vmatpush1.msra.mxu0 %v418
    %444 = vmatprep.subr.mxu0 0.0
    %445 = vmatpush1.msra.mxu0 %v419
    %446 = vmatprep.subr.mxu0 0.0
    %447 = vmatpush1.msra.mxu0 %v420
    %448 = vmatprep.subr.mxu0 0.0
    %449 = vmatpush1.msra.mxu0 %v421
    %450 = vmatprep.subr.mxu0 0.0
    %451 = vmatpush1.msra.mxu0 %v422
    %452 = vmatprep.subr.mxu0 0.0
    %453 = vmatpush1.msra.mxu0 %v423
    %454 = vmatprep.subr.mxu0 0.0
    %455 = vmatpush1.msra.mxu0 %v424
    %456 = vmatprep.subr.mxu0 0.0
    %457 = vmatpush1.msra.mxu0 %v425
    %458 = vmatprep.subr.mxu0 0.0
    %459 = vmatpush1.msra.mxu0 %v426
    %460 = vmatprep.subr.mxu0 0.0
    %461 = vmatpush1.msra.mxu0 %v427
    %462 = vmatprep.subr.mxu0 0.0
    %463 = vmatpush1.msra.mxu0 %v428
    %464 = vmatprep.subr.mxu0 0.0
    %465 = vmatpush1.msra.mxu0 %v429
    %466 = vmatprep.subr.mxu0 0.0
    %467 = vmatpush1.msra.mxu0 %v430
    %468 = vmatprep.subr.mxu0 0.0
    %469 = vmatpush1.msra.mxu0 %v431
    %470 = vmatprep.subr.mxu0 0.0
    %471 = vmatpush1.msra.mxu0 %v432
    %472 = vmatprep.subr.mxu0 0.0
    %473 = vmatpush1.msra.mxu0 0.0
    %474 = vmatprep.subr.mxu0 0.0
    %475 = vmatpush1.msra.mxu0 0.0
    %476 = vmatprep.subr.mxu0 0.0
    %477 = vmatpush1.msra.mxu0 0.0
    %478 = vmatprep.subr.mxu0 0.0
    %479 = vmatpush1.msra.mxu0 0.0
    %480 = vmatprep.subr.mxu0 0.0
    %481 = vmatpush1.msra.mxu0 0.0
    %482 = vmatprep.subr.mxu0 0.0
    %483 = vmatpush1.msra.mxu0 0.0
    %484 = vmatprep.subr.mxu0 0.0
    %485 = vmatpush1.msra.mxu0 0.0
    %486 = vmatprep.subr.mxu0 0.0
    %487 = vmatpush1.msra.mxu0 0.0
    %488 = vmatprep.subr.mxu0 0.0
    %489 = vmatpush1.msra.mxu0 0.0
    %490 = vmatprep.subr.mxu0 0.0
    %491 = vmatpush1.msra.mxu0 0.0
    %492 = vmatprep.subr.mxu0 0.0
    %493 = vmatpush1.msra.mxu0 0.0
    %494 = vmatprep.subr.mxu0 0.0
    %495 = vmatpush1.msra.mxu0 0.0
    %496 = vmatprep.subr.mxu0 0.0
    %497 = vmatpush1.msra.mxu0 0.0
    %498 = vmatprep.subr.mxu0 0.0
    %499 = vmatpush1.msra.mxu0 0.0
    %500 = vmatprep.subr.mxu0 0.0
    %501 = vmatpush1.msra.mxu0 0.0
    %502 = vmatprep.subr.mxu0 0.0
    %503 = vmatpush1.msra.mxu0 0.0
    %504 = vmatprep.mubr.f32.mxu0 0.0
    %505 = vmatmul.mubr.f32.gmra.mrb[0].mxu0 %v416
    %v506 = vpop.f32.mrb[0].mxu0
    %v507 = vadd.f32 %v438, %v506
    %v508 = vpop.f32.mrb[0].mxu0
    %509 = vdwg.mxu0
    %510 = vst [vmem:[%s9] sm:$0xff] %v507
    // Predicated region
    $region54: #{neural_net_forward.1} parent=1 // pred_check
      _
    $region55: #{neural_net_forward.1} parent=1 // pred_check_branch
      %512 = sbr.rel (0) target = $region57
    $region56: #{neural_net_forward.1} parent=1 // pred_region
      _
    $region57: #{neural_net_forward.1} parent=1 // pred_fallthru
      _
    // Predicated region
    $region58: #{neural_net_forward.1} parent=1 // pred_check
      _
    $region59: #{neural_net_forward.1} parent=1 // pred_check_branch
      %514 = sbr.rel (0) target = $region61
    $region60: #{neural_net_forward.1} parent=1 // pred_region
      _
    $region61: #{neural_net_forward.1} parent=1 // pred_fallthru
      _
    %515 = vsyncpa [#allocation3], 1
    %516 = vsyncpa [#allocation5], 1
    %517 = vsyncpa [#allocation8], 1

</llo_original>
